<compile_context>
chip_gen: v7x
topology: tpu7x:2x2x1
jax: 0.10.0
libtpu: 0.0.40
codegen_flags: <defaults>
</compile_context>

<pallas_src>
import jax
import jax.numpy as jnp
from jax.experimental import pallas as pl
from jax.experimental.pallas import tpu as pltpu

_LANES = 128


def _loss_ce_kernel(labels_ref, outs_ref, partial_ref, acc_ref):
    """grid = (num_splits, steps).  Inner ("arbitrary") axis streams
    lane-dense (row_tile, 128) tiles; accumulate elementwise into a VMEM
    vector accumulator and reduce to one scalar per split only on the last
    inner step."""
    j = pl.program_id(1)

    @pl.when(j == 0)
    def _():
        acc_ref[...] = jnp.zeros_like(acc_ref)

    labels = labels_ref[...].astype(jnp.float32)
    probs = outs_ref[...].astype(jnp.float32)
    # NOTE: matches the PyTorch reference's 0 * log(0) = NaN hazard on purpose.
    acc_ref[...] += labels * jnp.log(probs)

    @pl.when(j == pl.num_programs(1) - 1)
    def _():
        partial = jnp.sum(acc_ref[...])
        partial_ref[...] = jnp.broadcast_to(partial, partial_ref.shape)


def loss_ce(labels: jax.Array, outs: jax.Array, *, row_tile: int = 4096,
            num_splits: int = 2) -> jax.Array:
    """Pallas implementation of  -(labels * log(outs)).sum(1).mean()  for 2-D
    (batch, classes) inputs.  Returns a float32 scalar."""
    assert labels.shape == outs.shape and labels.ndim == 2
    B, C = labels.shape
    total = B * C

    # --- lane-dense layout -------------------------------------------------
    rows_needed = pl.cdiv(total, _LANES)
    # Shrink the tile for tiny problems; keep it a multiple of 8 sublanes.
    row_tile = max(8, min(row_tile, ((rows_needed + 7) // 8) * 8))
    if rows_needed < 2 * row_tile:
        num_splits = 1  # too small to shard across TensorCores
    chunk_rows = num_splits * row_tile
    padded_rows = pl.cdiv(rows_needed, chunk_rows) * chunk_rows
    pad = padded_rows * _LANES - total

    # Pad labels with 0 and probabilities with 1: 0 * log(1) == 0 contribution.
    lab = jnp.pad(labels.reshape(-1), (0, pad), constant_values=0)
    prob = jnp.pad(outs.reshape(-1), (0, pad), constant_values=1)
    lab = lab.reshape(padded_rows, _LANES)
    prob = prob.reshape(padded_rows, _LANES)

    steps = padded_rows // chunk_rows  # inner (reduction) grid extent

    partials = pl.pallas_call(
        _loss_ce_kernel,
        out_shape=jax.ShapeDtypeStruct((num_splits, 8, _LANES), jnp.float32),
        grid_spec=pltpu.PrefetchScalarGridSpec(
            num_scalar_prefetch=0,
            grid=(num_splits, steps),
            in_specs=[
                pl.BlockSpec((row_tile, _LANES), lambda s, j: (s * steps + j, 0)),
                pl.BlockSpec((row_tile, _LANES), lambda s, j: (s * steps + j, 0)),
            ],
            out_specs=pl.BlockSpec((1, 8, _LANES), lambda s, j: (s, 0, 0)),
            scratch_shapes=[pltpu.VMEM((row_tile, _LANES), jnp.float32)],
        ),
        compiler_params=pltpu.CompilerParams(
            # outer axis: independent partial sums (megacore on v7x);
            # inner axis: sequential reduction into the VMEM accumulator.
            dimension_semantics=("parallel", "arbitrary"),
            # 2 inputs x 2 buffers x 2 MiB + 2 MiB accumulator ~= 10 MiB;
            # 32 MiB leaves headroom yet stays within v7x's 64 MiB physical VMEM.
            vmem_limit_bytes=32 * 1024 * 1024,
        ),
    )(lab, prob)

    # Tiny wrapper epilogue: combine per-split partials, negate, mean over batch.
    return (-(jnp.sum(partials[:, 0, 0]) / B)).astype(jnp.float32)


if __name__ == "__main__":
    key = jax.random.PRNGKey(0)
    k1, k2 = jax.random.split(key)

    B, C = 16, 32  # small shapes consistent with (batch, num_classes)

    # "labels": soft targets (rows sum to 1), "outs": model probabilities.
    labels = jax.nn.softmax(jax.random.normal(k1, (B, C), dtype=jnp.float32), axis=1)
    outs = jax.nn.softmax(jax.random.normal(k2, (B, C), dtype=jnp.float32), axis=1)

    loss = loss_ce(labels, outs)
    jax.block_until_ready(loss)

    # sanity check against pure-JAX reference of the PyTorch forward
    ref = -(labels * jnp.log(outs)).sum(1).mean()
    assert jnp.allclose(loss, ref, rtol=1e-5, atol=1e-5), (loss, ref)

    print("KERNEL_OK")
</pallas_src>

<mosaic_0001>
module attributes {stable_mosaic.version = 11 : i64} {
  func.func @_loss_ce_kernel(%arg0: i32, %arg1: i32, %arg2: memref<8x128xf32, #tpu.memory_space<vmem>>, %arg3: memref<8x128xf32, #tpu.memory_space<vmem>>, %arg4: memref<1x8x128xf32, #tpu.memory_space<vmem>>, %arg5: memref<8x128xf32, #tpu.memory_space<vmem>>) attributes {dimension_semantics = [#tpu.dimension_semantics<parallel>, #tpu.dimension_semantics<arbitrary>], iteration_bounds = array<i64: 1, 1>, scalar_prefetch = 0 : i64, scratch_operands = 1 : i64, tpu.core_type = #tpu.core_type<tc>, window_params = [{transform_indices = @transform_0, window_bounds = array<i64: 8, 128>}, {transform_indices = @transform_1, window_bounds = array<i64: 8, 128>}, {transform_indices = @transform_2, window_bounds = array<i64: 1, 8, 128>}]} {
    %c0_i32 = arith.constant 0 : i32
    %0 = arith.cmpi eq, %arg1, %c0_i32 : i32
    %1 = arith.extui %0 : i1 to i32
    %c0_i32_0 = arith.constant 0 : i32
    %2 = arith.cmpi ne, %1, %c0_i32_0 : i32
    scf.if %2 {
      %cst = arith.constant 0.000000e+00 : f32
      %13 = vector.broadcast %cst : f32 to vector<8x128xf32>
      %c0_10 = arith.constant 0 : index
      %c0_11 = arith.constant 0 : index
      %14 = vector.load %arg5[%c0_10, %c0_11] : memref<8x128xf32, #tpu.memory_space<vmem>>, vector<8x128xf32>
      tpu.vector_store %arg5[%c0_10, %c0_11], %13 {strides = array<i32>} : memref<8x128xf32, #tpu.memory_space<vmem>>, vector<8x128xf32>,
    } else {
    }
    %c0 = arith.constant 0 : index
    %c0_1 = arith.constant 0 : index
    %3 = vector.load %arg2[%c0, %c0_1] : memref<8x128xf32, #tpu.memory_space<vmem>>, vector<8x128xf32>
    %c0_2 = arith.constant 0 : index
    %c0_3 = arith.constant 0 : index
    %4 = vector.load %arg3[%c0_2, %c0_3] : memref<8x128xf32, #tpu.memory_space<vmem>>, vector<8x128xf32>
    %c0_4 = arith.constant 0 : index
    %c0_5 = arith.constant 0 : index
    %5 = vector.load %arg5[%c0_4, %c0_5] : memref<8x128xf32, #tpu.memory_space<vmem>>, vector<8x128xf32>
    %6 = math.log %4 : vector<8x128xf32>
    %7 = arith.mulf %3, %6 : vector<8x128xf32>
    %8 = arith.addf %5, %7 : vector<8x128xf32>
    %c0_6 = arith.constant 0 : index
    %c0_7 = arith.constant 0 : index
    %9 = vector.load %arg5[%c0_6, %c0_7] : memref<8x128xf32, #tpu.memory_space<vmem>>, vector<8x128xf32>
    tpu.vector_store %arg5[%c0_6, %c0_7], %8 {strides = array<i32>} : memref<8x128xf32, #tpu.memory_space<vmem>>, vector<8x128xf32>,
    %c0_i32_8 = arith.constant 0 : i32
    %10 = arith.cmpi eq, %arg1, %c0_i32_8 : i32
    %11 = arith.extui %10 : i1 to i32
    %c0_i32_9 = arith.constant 0 : i32
    %12 = arith.cmpi ne, %11, %c0_i32_9 : i32
    scf.if %12 {
      %c0_10 = arith.constant 0 : index
      %c0_11 = arith.constant 0 : index
      %13 = vector.load %arg5[%c0_10, %c0_11] : memref<8x128xf32, #tpu.memory_space<vmem>>, vector<8x128xf32>
      %14 = vector.shape_cast %13 : vector<8x128xf32> to vector<1x8x128xf32>
      %cst = arith.constant dense<0.000000e+00> : vector<1xf32>
      %15 = vector.multi_reduction <add>, %14, %cst [1, 2] : vector<1x8x128xf32> to vector<1xf32>
      %16 = vector.shape_cast %15 : vector<1xf32> to vector<1x1x1xf32>
      %17 = vector.extract %16[0, 0, 0] : f32 from vector<1x1x1xf32>
      %18 = vector.broadcast %17 : f32 to vector<1x8x128xf32>
      %c0_12 = arith.constant 0 : index
      %c0_13 = arith.constant 0 : index
      %c0_14 = arith.constant 0 : index
      %19 = vector.load %arg4[%c0_12, %c0_13, %c0_14] : memref<1x8x128xf32, #tpu.memory_space<vmem>>, vector<1x8x128xf32>
      tpu.vector_store %arg4[%c0_12, %c0_13, %c0_14], %18 {strides = array<i32>} : memref<1x8x128xf32, #tpu.memory_space<vmem>>, vector<1x8x128xf32>,
    } else {
    }
    return
  }
  func.func @transform_0(%arg0: i32, %arg1: i32) -> (i32, i32) {
    %c1_i32 = arith.constant 1 : i32
    %0 = arith.muli %arg0, %c1_i32 : i32
    %1 = arith.addi %0, %arg1 : i32
    %c0_i32 = arith.constant 0 : i32
    %c0_i32_0 = arith.constant 0 : i32
    return %1, %c0_i32 : i32, i32
  }
  func.func @transform_1(%arg0: i32, %arg1: i32) -> (i32, i32) {
    %c1_i32 = arith.constant 1 : i32
    %0 = arith.muli %arg0, %c1_i32 : i32
    %1 = arith.addi %0, %arg1 : i32
    %c0_i32 = arith.constant 0 : i32
    %c0_i32_0 = arith.constant 0 : i32
    return %1, %c0_i32 : i32, i32
  }
  func.func @transform_2(%arg0: i32, %arg1: i32) -> (i32, i32, i32) {
    %c0_i32 = arith.constant 0 : i32
    %c0_i32_0 = arith.constant 0 : i32
    %c0_i32_1 = arith.constant 0 : i32
    return %arg0, %c0_i32, %c0_i32_0 : i32, i32, i32
  }
}

</mosaic_0001>

<llo_original>
// kernel: tpu_custom_call.1
$region0: #{tpu_custom_call.1}
  #allocation0 [shape = 'u32[]', space=smem, size = 0x4, offset = 0x4, fixed_abs, tag = 'smem constant byte address 0x4 - core index']
  #allocation1 [shape = 'u32[144,128]{1,0:T(1,128)}', space=vmem, size = 0x12000, scoped, tag = 'internal scratch']
  #allocation2 [shape = 'f32[8,128]{1,0:T(8,128)}', space=vmem, size = 0x1000, scoped, tag = 'scratch operand']
  %s0 = inlined_call_operand.hbm [shape: f32[8,128], index: 0, kind: input, shape index: {}]
  %s1 = inlined_call_operand.hbm [shape: f32[8,128], index: 1, kind: input, shape index: {}]
  %s2 = inlined_call_operand.hbm [shape: f32[1,8,128], index: 2, kind: output, shape index: {}]
  %s3 = sld [smem:[#allocation0]]
  $region34: #{tpu_custom_call.1} parent=0
    _
  %s5 = ssub.s32 1, %s3
  %s6 = scalar_select 0, %s5, %s3
  $region1: #{tpu_custom_call.1} parent=0
    #allocation3 [shape = 'u8[4096]{0}', space=vmem, size = 0x1000, scoped, tag = 'input window, operand 0, single buffered']
    #allocation4 [shape = 's32[1]{0}', space=sflag, size = 0x4, scoped, tag = 'scoped memory for tpu_custom_call.1']
    #allocation5 [shape = 's32[1]{0}', space=sflag, size = 0x4, scoped, tag = 'scoped memory for tpu_custom_call.1']
    #allocation6 [shape = 'u8[4096]{0}', space=vmem, size = 0x1000, scoped, tag = 'input window, operand 1, single buffered']
    #allocation7 [shape = 's32[1]{0}', space=sflag, size = 0x4, scoped, tag = 'scoped memory for tpu_custom_call.1']
    #allocation8 [shape = 'u8[4096]{0}', space=vmem, size = 0x1000, scoped, tag = 'output window, operand 0, single buffered']
    %7 = vsyncpa [#allocation4], 0
    %8 = vsyncpa [#allocation7], 0
    %9 = vsyncpa [#allocation5], 0
    // Predicated region
    $region2: #{tpu_custom_call.1} parent=1 // pred_check
      _
    $region3: #{tpu_custom_call.1} parent=1 // pred_check_branch
      %11 = sbr.rel (0) target = $region5
    $region4: #{tpu_custom_call.1} parent=1 // pred_region
      %s12 = sadd.s32 0, 0
      %s14 = ssub.s32 128, 128
      %15 = vsyncadd [#allocation4], %s14
      %s16 = smul.addr %s12, 128
      %s17 = scalar_lea.hbm %s0, %s16
      %s19 = sshll.u32 [#allocation3], 4
      %s20 = int_to_ptr.vmem [resolvable:$true] %s19
      %22 = dma.hbm_to_vmem [thread:$0]  %s17, 128, %s20, [#allocation4]
    $region5: #{tpu_custom_call.1} parent=1 // pred_fallthru
      _
    // Predicated region
    $region6: #{tpu_custom_call.1} parent=1 // pred_check
      _
    $region7: #{tpu_custom_call.1} parent=1 // pred_check_branch
      %24 = sbr.rel (0) target = $region9
    $region8: #{tpu_custom_call.1} parent=1 // pred_region
      %s25 = sadd.s32 0, 0
      %s27 = ssub.s32 128, 128
      %28 = vsyncadd [#allocation7], %s27
      %s29 = smul.addr %s25, 128
      %s30 = scalar_lea.hbm %s1, %s29
      %s32 = sshll.u32 [#allocation6], 4
      %s33 = int_to_ptr.vmem [resolvable:$true] %s32
      %35 = dma.hbm_to_vmem [thread:$0]  %s30, 128, %s33, [#allocation7]
    $region9: #{tpu_custom_call.1} parent=1 // pred_fallthru
      _
    // Predicated region
    $region10: #{tpu_custom_call.1} parent=1 // pred_check
      _
    $region11: #{tpu_custom_call.1} parent=1 // pred_check_branch
      %37 = sbr.rel (0) target = $region13
    $region12: #{tpu_custom_call.1} parent=1 // pred_region
      %38 = dma.done [#allocation4], 128
    $region13: #{tpu_custom_call.1} parent=1 // pred_fallthru
      _
    // Predicated region
    $region14: #{tpu_custom_call.1} parent=1 // pred_check
      _
    $region15: #{tpu_custom_call.1} parent=1 // pred_check_branch
      %40 = sbr.rel (0) target = $region17
    $region16: #{tpu_custom_call.1} parent=1 // pred_region
      %41 = dma.done [#allocation7], 128
    $region17: #{tpu_custom_call.1} parent=1 // pred_fallthru
      _
    %s42 = sadd.s32 0, 0
    %s43 = sadd.s32 0, 0
    %p44 = scmp.eq.s32.totalorder 0, 0
    // Predicated region
    $region18: #{tpu_custom_call.1} parent=1 // pred_check
      %p45 = pneg %p44
    $region19: #{tpu_custom_call.1} parent=1 // pred_check_branch
      %47 = sbr.rel (%p45) target = $region21
    $region20: #{tpu_custom_call.1} parent=1 // pred_region
      %48 = vst [vmem:[#allocation2] sm:$0xff] 0.0
    $region21: #{tpu_custom_call.1} parent=1 // pred_fallthru
      _
    %v49 = vld [vmem:[#allocation3] sm:$0xff]
    %v50 = vld [vmem:[#allocation6] sm:$0xff]
    %v51 = vld [vmem:[#allocation2] sm:$0xff]
    %v52 = vlog2.pop %v50
    %v53 = vmul.f32 %v52, 0.6931472
    %v54 = vmul.f32 %v49, %v53
    %v55 = vadd.f32 %v51, %v54
    %56 = vst [vmem:[#allocation2] sm:$0xff] %v55
    // Predicated region
    $region22: #{tpu_custom_call.1} parent=1 // pred_check
      %p57 = pneg %p44
    $region23: #{tpu_custom_call.1} parent=1 // pred_check_branch
      %59 = sbr.rel (%p57) target = $region25
    $region24: #{tpu_custom_call.1} parent=1 // pred_region
      %v60 = vld [vmem:[#allocation2] sm:$0xff]
      %61 = vadd.xlane.f32.xlu0 %v60
      %v62 = vpop.xlane.xlu0 %61
      %v63 = vrot.slane %v62, 4
      %v64 = vadd.f32 %v62, %v63
      %v65 = vrot.slane %v64, 2
      %v66 = vadd.f32 %v64, %v65
      %v67 = vrot.slane %v66, 1
      %v68 = vadd.f32 %v66, %v67
      %s69 = vtos %v68
      %v70 = vstv %s69
      %71 = vst [vmem:[#allocation8] sm:$0xff] %v70
    $region25: #{tpu_custom_call.1} parent=1 // pred_fallthru
      _
    // Predicated region
    $region26: #{tpu_custom_call.1} parent=1 // pred_check
      _
    $region27: #{tpu_custom_call.1} parent=1 // pred_check_branch
      %73 = sbr.rel (0) target = $region29
    $region28: #{tpu_custom_call.1} parent=1 // pred_region
      %s75 = ssub.s32 128, 128
      %76 = vsyncadd [#allocation5], %s75
      %s78 = sshll.u32 [#allocation8], 4
      %s79 = int_to_ptr.vmem [resolvable:$true] %s78
      %81 = dma.vmem_to_hbm [thread:$0]  %s79, 128, %s2, [#allocation5]
    $region29: #{tpu_custom_call.1} parent=1 // pred_fallthru
      _
    // Predicated region
    $region30: #{tpu_custom_call.1} parent=1 // pred_check
      _
    $region31: #{tpu_custom_call.1} parent=1 // pred_check_branch
      %83 = sbr.rel (0) target = $region33
    $region32: #{tpu_custom_call.1} parent=1 // pred_region
      %84 = dma.done [#allocation5], 128
    $region33: #{tpu_custom_call.1} parent=1 // pred_fallthru
      _
    %85 = vsyncpa [#allocation4], 1
    %86 = vsyncpa [#allocation7], 1
    %87 = vsyncpa [#allocation5], 1

</llo_original>
